<compile_context>
chip_gen: v5e
topology: v5e:2x2
jax: 0.10.0
libtpu: 0.0.40
codegen_flags: <defaults>
</compile_context>

<pallas_src>
import jax
import jax.numpy as jnp
from jax.experimental import pallas as pl
from jax.experimental.pallas import tpu as pltpu

LEAKY_SLOPE = 0.2
IN_EPS = 1e-5
DEFAULT_TM = 512        # points per grid step for the [N, C] MLP kernels
DEFAULT_P = 128         # points per grid step for the [N, K, C] DDAP kernels
VMEM_LIMIT = 48 * 1024 * 1024


def _cdiv(a, b):
    return (a + b - 1) // b


def _round_up(x, m):
    return ((x + m - 1) // m) * m


def _cparams():
    return pltpu.CompilerParams(dimension_semantics=("parallel",),
                                vmem_limit_bytes=VMEM_LIMIT)


# ----------------------------------------------------------------------------
# Generic multi-input matmul + InstanceNorm statistics kernel
#   y = sum_i act_i(x_i) @ W_i        (act_i = optional InstanceNorm+LeakyReLU)
# plus per-tile sums / sums-of-squares of y (masked to the true N rows).
# ----------------------------------------------------------------------------
def _make_matmul_stats_kernel(n_in, norm_flags, total_n, tm):
    def kernel(*refs):
        idx = 0
        acc = None
        for i in range(n_in):
            x = refs[idx][...]
            idx += 1
            if norm_flags[i]:
                mean = refs[idx][...]
                rstd = refs[idx + 1][...]
                idx += 2
                x = (x - mean) * rstd
                x = jnp.where(x > 0, x, LEAKY_SLOPE * x)
            w = refs[idx][...]
            idx += 1
            part = jnp.dot(x.astype(jnp.bfloat16), w.astype(jnp.bfloat16),
                           preferred_element_type=jnp.float32)
            acc = part if acc is None else acc + part
        y_ref, s_ref, ss_ref = refs[idx:]
        y_ref[...] = acc
        rows = (jax.lax.broadcasted_iota(jnp.int32, (tm, 1), 0)
                + pl.program_id(0) * tm)
        yv = jnp.where(rows < total_n, acc, 0.0)
        s_ref[...] = jnp.sum(yv, axis=0, keepdims=True)
        ss_ref[...] = jnp.sum(yv * yv, axis=0, keepdims=True)
    return kernel


def _matmul_stats(inputs, weights):
    """inputs: list whose entries are either an array x, or a tuple
    (y, mean, rstd) meaning 'apply InstanceNorm (full-N stats) + LeakyReLU to y
    inside the kernel before the matmul'.  weights: per-input [Cin_i, Cout]
    row-chunks of the full weight.  Conv bias is skipped (cancelled by the
    affine-free InstanceNorm that always follows).  Returns raw y plus its
    exact full-N InstanceNorm statistics."""
    norm_flags = tuple(isinstance(a, tuple) for a in inputs)
    first = inputs[0]
    n = (first[0] if isinstance(first, tuple) else first).shape[0]
    cout = weights[0].shape[1]
    tm = min(DEFAULT_TM, _round_up(n, 8))
    nt = _cdiv(n, tm)

    operands, in_specs = [], []
    for a, w in zip(inputs, weights):
        if isinstance(a, tuple):
            x, mean, rstd = a
            cin = x.shape[1]
            operands += [x, mean, rstd]
            in_specs += [pl.BlockSpec((tm, cin), lambda i: (i, 0)),
                         pl.BlockSpec((1, cin), lambda i: (0, 0)),
                         pl.BlockSpec((1, cin), lambda i: (0, 0))]
        else:
            x = a
            cin = x.shape[1]
            operands.append(x)
            in_specs.append(pl.BlockSpec((tm, cin), lambda i: (i, 0)))
        operands.append(w)
        in_specs.append(pl.BlockSpec((cin, cout), lambda i: (0, 0)))

    kernel = _make_matmul_stats_kernel(len(inputs), norm_flags, n, tm)
    y, s, ss = pl.pallas_call(
        kernel,
        grid=(nt,),
        in_specs=in_specs,
        out_specs=(pl.BlockSpec((tm, cout), lambda i: (i, 0)),
                   pl.BlockSpec((1, cout), lambda i: (i, 0)),
                   pl.BlockSpec((1, cout), lambda i: (i, 0))),
        out_shape=(jax.ShapeDtypeStruct((n, cout), jnp.float32),
                   jax.ShapeDtypeStruct((nt, cout), jnp.float32),
                   jax.ShapeDtypeStruct((nt, cout), jnp.float32)),
        compiler_params=_cparams(),
    )(*operands)
    mean = jnp.sum(s, axis=0, keepdims=True) * (1.0 / n)
    var = jnp.sum(ss, axis=0, keepdims=True) * (1.0 / n) - mean * mean
    rstd = jax.lax.rsqrt(jnp.maximum(var, 0.0) + IN_EPS)
    return y, mean, rstd, tm, nt


def _norm_act_kernel(y_ref, mean_ref, rstd_ref, o_ref):
    y = (y_ref[...] - mean_ref[...]) * rstd_ref[...]
    o_ref[...] = jnp.where(y > 0, y, LEAKY_SLOPE * y)


def _norm_act(y, mean, rstd, tm, nt):
    n, cout = y.shape
    return pl.pallas_call(
        _norm_act_kernel,
        grid=(nt,),
        in_specs=[pl.BlockSpec((tm, cout), lambda i: (i, 0)),
                  pl.BlockSpec((1, cout), lambda i: (0, 0)),
                  pl.BlockSpec((1, cout), lambda i: (0, 0))],
        out_specs=pl.BlockSpec((tm, cout), lambda i: (i, 0)),
        out_shape=jax.ShapeDtypeStruct((n, cout), jnp.float32),
        compiler_params=_cparams(),
    )(y, mean, rstd)


def mlp_layer(inputs, weights):
    # one Conv1d(k=1)+InstanceNorm1d(N)+LeakyReLU layer (bias cancelled by IN)
    y, mean, rstd, tm, nt = _matmul_stats(inputs, weights)
    return _norm_act(y, mean, rstd, tm, nt)


def mlp_forward(x, layers):
    for w, _b in layers:
        x = mlp_layer([x], [w])
    return x


# ----------------------------------------------------------------------------
# Fused DDAP stage:
#   neighbor conv (Conv1d k=1 + InstanceNorm over K + LeakyReLU)
#   + feature distance + dual-distance attention + softmax(K) + weighted pool
#   + first matmul (and partial stats) of the following MLP
# one point-block per grid step.
# ----------------------------------------------------------------------------
def _ddap_stage_compute(lr_ref, fn_ref, fc_ref, gd_ref, wc_ref, wgd_ref,
                        wfd_ref, wf_ref):
    p, k, ci = lr_ref.shape
    cc = wc_ref.shape[1]
    cf = fn_ref.shape[2]
    d = cf + cc

    # --- neighbor conv (bias cancelled by the per-point InstanceNorm over K)
    x = lr_ref[...].reshape(p * k, ci)
    y = jnp.dot(x.astype(jnp.bfloat16), wc_ref[...].astype(jnp.bfloat16),
                preferred_element_type=jnp.float32).reshape(p, k, cc)
    mean = jnp.mean(y, axis=1, keepdims=True)
    var = jnp.mean(y * y, axis=1, keepdims=True) - mean * mean
    y = (y - mean) * jax.lax.rsqrt(jnp.maximum(var, 0.0) + IN_EPS)
    lr = jnp.where(y > 0, y, LEAKY_SLOPE * y)                      # [P, K, Cc]

    # --- feature distance (exp(-mean|f - f_neigh|))
    f_neigh = fn_ref[...]                                          # [P, K, Cf]
    feat = fc_ref[...]                                             # [P, Cf]
    fd = jnp.mean(jnp.abs(feat[:, None, :] - f_neigh), axis=2, keepdims=True)
    f_dis = jnp.exp(-fd)                                           # [P, K, 1]

    # --- attention: [g_dis, 0.1*f_dis, f_concat] @ W_fc (concat never in HBM)
    fcat = jnp.concatenate([f_neigh, lr], axis=2)                  # [P, K, D]
    att = jnp.dot(fcat.reshape(p * k, d).astype(jnp.bfloat16),
                  wf_ref[...].astype(jnp.bfloat16),
                  preferred_element_type=jnp.float32).reshape(p, k, d)
    att = att + gd_ref[...] * wgd_ref[...] + (0.1 * f_dis) * wfd_ref[...]

    # --- softmax over K, weighted sum
    att = att - jnp.max(att, axis=1, keepdims=True)
    e = jnp.exp(att)
    att = e * pl.reciprocal(jnp.sum(e, axis=1, keepdims=True), approx=True)
    pooled = jnp.sum(fcat * att, axis=1)                           # [P, D]
    return lr, pooled


def _make_ddap_kernel(emit_lr, total_n, p_blk):
    def kernel(lr_ref, fn_ref, fc_ref, gd_ref, wc_ref, wgd_ref, wfd_ref,
               wf_ref, wm_ref, *out_refs):
        lr, pooled = _ddap_stage_compute(lr_ref, fn_ref, fc_ref, gd_ref,
                                         wc_ref, wgd_ref, wfd_ref, wf_ref)
        # first matmul of the following MLP layer (bias cancelled by its IN)
        y = jnp.dot(pooled.astype(jnp.bfloat16), wm_ref[...].astype(jnp.bfloat16),
                    preferred_element_type=jnp.float32)
        if emit_lr:
            lr_out_ref, y_ref, s_ref, ss_ref = out_refs
            lr_out_ref[...] = lr
        else:
            y_ref, s_ref, ss_ref = out_refs
        y_ref[...] = y
        rows = (jax.lax.broadcasted_iota(jnp.int32, (p_blk, 1), 0)
                + pl.program_id(0) * p_blk)
        yv = jnp.where(rows < total_n, y, 0.0)
        s_ref[...] = jnp.sum(yv, axis=0, keepdims=True)
        ss_ref[...] = jnp.sum(yv * yv, axis=0, keepdims=True)
    return kernel


def ddap_stage(lr_in, f_neigh, feat, g_dis, conv_w, fc_w, mlp_layers, emit_lr):
    n, k, ci = lr_in.shape
    cf = f_neigh.shape[2]
    cc = conv_w.shape[1]
    d = cf + cc
    w_mlp = mlp_layers[0][0]
    cm = w_mlp.shape[1]
    # pre-split the attention fc weight rows (g_dis, f_dis, features)
    w_gd = fc_w[0:1, :]
    w_fd = fc_w[1:2, :]
    w_f = fc_w[2:, :]
    p_blk = min(DEFAULT_P, _round_up(n, 8))
    nt = _cdiv(n, p_blk)

    in_specs = [
        pl.BlockSpec((p_blk, k, ci), lambda i: (i, 0, 0)),
        pl.BlockSpec((p_blk, k, cf), lambda i: (i, 0, 0)),
        pl.BlockSpec((p_blk, cf), lambda i: (i, 0)),
        pl.BlockSpec((p_blk, k, 1), lambda i: (i, 0, 0)),
        pl.BlockSpec((ci, cc), lambda i: (0, 0)),
        pl.BlockSpec((1, d), lambda i: (0, 0)),
        pl.BlockSpec((1, d), lambda i: (0, 0)),
        pl.BlockSpec((d, d), lambda i: (0, 0)),
        pl.BlockSpec((d, cm), lambda i: (0, 0)),
    ]
    y_spec = pl.BlockSpec((p_blk, cm), lambda i: (i, 0))
    st_spec = pl.BlockSpec((1, cm), lambda i: (i, 0))
    y_shapes = (jax.ShapeDtypeStruct((n, cm), jnp.float32),
                jax.ShapeDtypeStruct((nt, cm), jnp.float32),
                jax.ShapeDtypeStruct((nt, cm), jnp.float32))
    kernel = _make_ddap_kernel(emit_lr, n, p_blk)
    args = (lr_in, f_neigh, feat, g_dis, conv_w, w_gd, w_fd, w_f, w_mlp)

    if emit_lr:
        lr_out, y, s, ss = pl.pallas_call(
            kernel, grid=(nt,), in_specs=in_specs,
            out_specs=(pl.BlockSpec((p_blk, k, cc), lambda i: (i, 0, 0)),
                       y_spec, st_spec, st_spec),
            out_shape=(jax.ShapeDtypeStruct((n, k, cc), jnp.float32),) + y_shapes,
            compiler_params=_cparams())(*args)
    else:
        lr_out = None
        y, s, ss = pl.pallas_call(
            kernel, grid=(nt,), in_specs=in_specs,
            out_specs=(y_spec, st_spec, st_spec),
            out_shape=y_shapes,
            compiler_params=_cparams())(*args)

    mean = jnp.sum(s, axis=0, keepdims=True) * (1.0 / n)
    var = jnp.sum(ss, axis=0, keepdims=True) * (1.0 / n) - mean * mean
    rstd = jax.lax.rsqrt(jnp.maximum(var, 0.0) + IN_EPS)
    tm = min(DEFAULT_TM, _round_up(n, 8))
    f = _norm_act(y, mean, rstd, tm, _cdiv(n, tm))
    f = mlp_forward(f, mlp_layers[1:])
    return lr_out, f


# ----------------------------------------------------------------------------
# Fused final head: normalize+LeakyReLU of last pre-classify layer + Linear(32,1)
# + Sigmoid + NaN->0   (clamp(0,1) after sigmoid is a no-op and is dropped)
# ----------------------------------------------------------------------------
def _norm_act_classify_kernel(y_ref, mean_ref, rstd_ref, w_ref, b_ref, o_ref):
    y = (y_ref[...] - mean_ref[...]) * rstd_ref[...]
    y = jnp.where(y > 0, y, LEAKY_SLOPE * y)
    z = jnp.dot(y.astype(jnp.bfloat16), w_ref[...].astype(jnp.bfloat16),
                preferred_element_type=jnp.float32) + b_ref[...]
    z = 1.0 / (1.0 + jnp.exp(-z))
    o_ref[...] = jnp.where(jnp.isnan(z), jnp.zeros_like(z), z)


def classify_head(x, pre_layers, cls_w, cls_b):
    # TODO(synk): nn.Dropout(0.5) treated as eval-mode identity (no masking).
    n = x.shape[0]
    # pre-classify chain: each layer normalizes the previous raw y in-kernel
    y, mean, rstd, tm, nt = _matmul_stats([x], [pre_layers[0][0]])
    for w, _b in pre_layers[1:]:
        y, mean, rstd, tm, nt = _matmul_stats([(y, mean, rstd)], [w])
    cout = y.shape[1]
    out = pl.pallas_call(
        _norm_act_classify_kernel,
        grid=(nt,),
        in_specs=[pl.BlockSpec((tm, cout), lambda i: (i, 0)),
                  pl.BlockSpec((1, cout), lambda i: (0, 0)),
                  pl.BlockSpec((1, cout), lambda i: (0, 0)),
                  pl.BlockSpec((cout, 1), lambda i: (0, 0)),
                  pl.BlockSpec((1, 1), lambda i: (0, 0))],
        out_specs=pl.BlockSpec((tm, 1), lambda i: (i, 0)),
        out_shape=jax.ShapeDtypeStruct((n, 1), jnp.float32),
        compiler_params=_cparams(),
    )(y, mean, rstd, cls_w, cls_b.reshape(1, 1))
    return out


# ----------------------------------------------------------------------------
# JAX glue (gathers / geometry / pooling)
# ----------------------------------------------------------------------------
def pad_zero_row(x):
    return jnp.concatenate([x, jnp.zeros((1, x.shape[1]), x.dtype)], axis=0)


def gather_rows(x, idx):
    return jnp.take(x, idx, axis=0)


def max_pool(x, inds):
    pooled = gather_rows(pad_zero_row(x), inds)        # [n2, Kp, d]
    return jnp.max(pooled, axis=1)


def closest_pool(x, inds):
    return gather_rows(pad_zero_row(x), inds[:, 0])


def lpr(xyz, neigh_idx, lengths):
    # Local Polar Representation (geometric preprocessing).
    n, k = neigh_idx.shape
    xyz_pad = jnp.concatenate([xyz, jnp.zeros((1, 3), xyz.dtype)], axis=0)
    neighbor_xyz = gather_rows(xyz_pad, neigh_idx)                      # [N,K,3]
    xyz_tile = jnp.broadcast_to(xyz[:, None, :], (n, k, 3))
    rel = xyz_tile - neighbor_xyz
    rel_alpha = jnp.arctan2(rel[:, :, 1], rel[:, :, 0])[:, :, None]
    rel_xydis = jnp.sqrt(jnp.sum(rel[:, :, :2] ** 2, axis=-1))
    rel_beta = jnp.arctan2(rel[:, :, 2], rel_xydis)[:, :, None]
    rel_dis = jnp.sqrt(jnp.sum(rel ** 2, axis=2, keepdims=True))
    relative_info = jnp.concatenate([rel_dis, xyz_tile, neighbor_xyz], axis=2)
    exp_dis = jnp.exp(-rel_dis)
    local_volume = jnp.max(jnp.max(rel_dis, axis=2), axis=1) ** 3

    neighbor_mean = jnp.mean(neighbor_xyz, axis=1)
    direction = xyz - neighbor_mean
    dir_tile = jnp.broadcast_to(direction[:, None, :], (n, k, 3))
    dir_alpha = jnp.arctan2(dir_tile[:, :, 1], dir_tile[:, :, 0])[:, :, None]
    dir_xydis = jnp.sqrt(jnp.sum(dir_tile[:, :, :2] ** 2, axis=2))
    dir_beta = jnp.arctan2(dir_tile[:, :, 2], dir_xydis)[:, :, None]

    angle = jnp.concatenate([rel_alpha - dir_alpha, rel_beta - dir_beta], axis=2)
    local_rep = jnp.concatenate([angle, relative_info], axis=2)         # [N,K,9]

    global_dis = jnp.sqrt(jnp.sum(xyz ** 2, axis=1))
    parts, prefix = [], 0
    for length in lengths:                                              # static python ints
        seg = global_dis[prefix:prefix + length]
        parts.append(jnp.broadcast_to(jnp.max(seg), (length,)))
        prefix += length
    global_volume = jnp.concatenate(parts, axis=0)
    lg_ratio = (local_volume / global_volume)[:, None]
    return local_rep, exp_dis, lg_ratio


# ----------------------------------------------------------------------------
# Modules
# ----------------------------------------------------------------------------
def ddap_forward(p, xyz, feature, neigh_idx, lengths):
    local_rep9, g_dis, lg_ratio = lpr(xyz, neigh_idx, lengths)
    w1, _ = p["conv1"]
    f_neigh = gather_rows(pad_zero_row(feature), neigh_idx)
    # stage 1: conv1 + dual-dis attention + pooling + mlp1 matmul (fused)
    lr1, f_lc = ddap_stage(local_rep9, f_neigh, feature, g_dis, w1,
                           p["fc1_w"], p["mlp1"], emit_lr=True)
    w2, _ = p["conv2"]
    f_neigh2 = gather_rows(pad_zero_row(f_lc), neigh_idx)
    # stage 2: conv2 + dual-dis attention + pooling + mlp2 matmul (fused)
    _, f_lc = ddap_stage(lr1, f_neigh2, f_lc, g_dis, w2,
                         p["fc2_w"], p["mlp2"], emit_lr=False)
    return f_lc, lg_ratio


def scf_forward(p, xyz, feature, neigh_idx, lengths):
    f_pc = mlp_forward(feature, p["conv1"])
    f_lc, lg_ratio = ddap_forward(p["ddap"], xyz, f_pc, neigh_idx, lengths)
    # conv2 / conv3 / conv4: matmul + stats only -- their InstanceNorm +
    # LeakyReLU is applied inside the fused conv5 first-layer kernel
    # (each has exactly one consumer: conv5).
    y2, m2, r2, _, _ = _matmul_stats([f_lc], [p["conv2"][0][0]])
    y3, m3, r3, _, _ = _matmul_stats([feature], [p["conv3"][0][0]])
    f_gc_in = jnp.concatenate([xyz, lg_ratio], axis=1)
    y4, m4, r4, _, _ = _matmul_stats([f_gc_in], [p["conv4"][0][0]])
    # conv5( cat([f_lc + shortcut, f_gc]) )  ==
    #   norm2 @ W[:2d] + norm3 @ W[:2d] + norm4 @ W[2d:]   (no HBM concat/add)
    w5 = p["conv5"][0][0]
    dsplit = p["conv2"][0][0].shape[1]
    out = mlp_layer([(y2, m2, r2), (y3, m3, r3), (y4, m4, r4)],
                    [w5[:dsplit], w5[:dsplit], w5[dsplit:]])
    return mlp_forward(out, p["conv5"][1:])


def upsample_forward(mlp_params, feats_will_up, up_idx, feats_upsampled):
    pooled = closest_pool(feats_will_up, up_idx)
    w0, _b0 = mlp_params[0]
    d1 = pooled.shape[1]
    # first layer consumes the two branches directly (no HBM concat)
    out = mlp_layer([pooled, feats_upsampled], [w0[:d1], w0[d1:]])
    return mlp_forward(out, mlp_params[1:])


def scfnet_forward(params, inputs):
    xyz = inputs["points"][0]
    features = mlp_forward(inputs["features"], params["fc"])
    lengths_list = inputs["stack_lengths"]

    feature_list = []
    for i, enc_p in enumerate(params["encoders"]):
        neigh_idx = inputs["neighbors"][i]
        lengths = lengths_list[i]
        features = scf_forward(enc_p, xyz, features, neigh_idx, lengths)
        if i == 0:
            feature_list.append(features)
        xyz = inputs["points"][i + 1]
        features = max_pool(features, inputs["pools"][i])
        feature_list.append(features)

    features = mlp_forward(features, params["last"])
    features = upsample_forward(params["up1"], features, inputs["upsamples"][-2], feature_list[-2])
    features = upsample_forward(params["up2"], features, inputs["upsamples"][-3], feature_list[-3])
    features = upsample_forward(params["up3"], features, inputs["upsamples"][-4], feature_list[-4])
    features = upsample_forward(params["up4"], features, inputs["upsamples"][-5], feature_list[-5])
    features = upsample_forward(params["up5"], features, inputs["upsamples"][-6], feature_list[-6])
    cls_w, cls_b = params["cls"]
    features = classify_head(features, params["pre_classify"], cls_w, cls_b)

    result, prefix = [], 0
    for length in lengths_list[0]:
        result.append(features[prefix:prefix + length, :])
        prefix += length
    return result


# ----------------------------------------------------------------------------
# Deterministic parameter / input construction
# ----------------------------------------------------------------------------
class KeyGen:
    def __init__(self, key):
        self.key = key

    def __call__(self):
        self.key, sub = jax.random.split(self.key)
        return sub


def _init_linear(kg, fan_in, fan_out, bias=True):
    w = jax.random.normal(kg(), (fan_in, fan_out), jnp.float32) * (1.0 / float(fan_in) ** 0.5)
    if bias:
        b = jax.random.normal(kg(), (fan_out,), jnp.float32) * 0.01
        return (w, b)
    return w


def init_mlp(kg, channels):
    return [_init_linear(kg, channels[i], channels[i + 1]) for i in range(len(channels) - 1)]


def init_ddap(kg, d_in, d_out):
    return {
        "conv1": _init_linear(kg, 9, d_in),
        "conv2": _init_linear(kg, d_in, d_out // 2),
        "fc1_w": _init_linear(kg, 2 * d_in + 2, 2 * d_in, bias=False),
        "fc2_w": _init_linear(kg, d_out + 2, d_out, bias=False),
        "mlp1": init_mlp(kg, [2 * d_in, d_out // 2]),
        "mlp2": init_mlp(kg, [d_out, d_out]),
    }


def init_scf(kg, d_in, d_out):
    return {
        "conv1": init_mlp(kg, [d_in, d_out // 2]),
        "conv2": init_mlp(kg, [d_out, 2 * d_out]),
        "conv3": init_mlp(kg, [d_in, 2 * d_out]),
        "conv4": init_mlp(kg, [4, 2 * d_out]),
        "conv5": init_mlp(kg, [4 * d_out, d_out]),
        "ddap": init_ddap(kg, d_out // 2, d_out),
    }


def init_scfnet(kg):
    dims = [(8, 16), (16, 64), (64, 128), (128, 256), (256, 512)]
    return {
        "fc": init_mlp(kg, [1, 8]),
        "encoders": [init_scf(kg, di, do) for di, do in dims],
        "last": init_mlp(kg, [512, 512]),
        "up1": init_mlp(kg, [768, 256]),
        "up2": init_mlp(kg, [384, 128]),
        "up3": init_mlp(kg, [192, 64]),
        "up4": init_mlp(kg, [80, 16]),
        "up5": init_mlp(kg, [32, 16]),
        "pre_classify": init_mlp(kg, [16, 64, 32]),
        "cls": _init_linear(kg, 32, 1),
    }


if __name__ == "__main__":
    kg = KeyGen(jax.random.PRNGKey(0))

    # stacked point-cloud pyramid (2 clouds stacked per level)
    N_lv = [32, 16, 8, 8, 8, 8]
    lengths = [[16, 16], [8, 8], [4, 4], [4, 4], [4, 4], [4, 4]]
    K = 8

    points = [jax.random.normal(kg(), (n, 3), jnp.float32) for n in N_lv]
    feats_in = jax.random.normal(kg(), (N_lv[0], 1), jnp.float32)
    neighbors = [
        jax.random.randint(kg(), (N_lv[i], K), 0, N_lv[i] + 1, jnp.int32) for i in range(5)
    ]
    pools = [
        jax.random.randint(kg(), (N_lv[i + 1], K), 0, N_lv[i] + 1, jnp.int32) for i in range(5)
    ]
    upsamples = [
        jax.random.randint(kg(), (N_lv[i], K), 0, N_lv[i + 1] + 1, jnp.int32) for i in range(5)
    ]
    upsamples.append(jnp.zeros((N_lv[5], K), jnp.int32))  # unused last entry (index -1)

    inputs = {
        "points": points,
        "features": feats_in,
        "stack_lengths": lengths,
        "neighbors": neighbors,
        "pools": pools,
        "upsamples": upsamples,
    }

    params = init_scfnet(kg)
    result = scfnet_forward(params, inputs)
    jax.block_until_ready(result)
    assert len(result) == 2
    assert result[0].shape == (16, 1) and result[1].shape == (16, 1)
    print("KERNEL_OK")
</pallas_src>

<mosaic_0001>
module attributes {stable_mosaic.version = 11 : i64} {
  func.func @kernel(%arg0: i32, %arg1: memref<32x1xf32, #tpu.memory_space<vmem>>, %arg2: memref<1x8xf32, #tpu.memory_space<vmem>>, %arg3: memref<32x8xf32, #tpu.memory_space<vmem>>, %arg4: memref<1x8xf32, #tpu.memory_space<vmem>>, %arg5: memref<1x8xf32, #tpu.memory_space<vmem>>) attributes {dimension_semantics = [#tpu.dimension_semantics<parallel>], iteration_bounds = array<i64: 1>, scalar_prefetch = 0 : i64, scratch_operands = 0 : i64, tpu.core_type = #tpu.core_type<tc>, window_params = [{transform_indices = @transform_0, window_bounds = array<i64: 32, 1>}, {pipeline_mode = #tpu.pipeline_mode<synchronous>, transform_indices = @transform_1, window_bounds = array<i64: 1, 8>}, {transform_indices = @transform_2, window_bounds = array<i64: 32, 8>}, {transform_indices = @transform_3, window_bounds = array<i64: 1, 8>}, {transform_indices = @transform_4, window_bounds = array<i64: 1, 8>}]} {
    %c0 = arith.constant 0 : index
    %c0_0 = arith.constant 0 : index
    %0 = vector.load %arg1[%c0, %c0_0] : memref<32x1xf32, #tpu.memory_space<vmem>>, vector<32x1xf32>
    %c0_1 = arith.constant 0 : index
    %c0_2 = arith.constant 0 : index
    %1 = vector.load %arg2[%c0_1, %c0_2] : memref<1x8xf32, #tpu.memory_space<vmem>>, vector<1x8xf32>
    %2 = arith.truncf %0 : vector<32x1xf32> to vector<32x1xbf16>
    %3 = arith.truncf %1 : vector<1x8xf32> to vector<1x8xbf16>
    %cst = arith.constant dense<0.000000e+00> : vector<32x8xf32>
    %4 = tpu.matmul %2, %3, %cst {dimension_numbers = #tpu.dot_dimension_numbers<[1], [0], [0], [1], [0, 0, 1, 1], [], []>} : vector<32x1xbf16>, vector<1x8xbf16>, vector<32x8xf32> -> vector<32x8xf32>
    %c0_3 = arith.constant 0 : index
    %c0_4 = arith.constant 0 : index
    %5 = vector.load %arg3[%c0_3, %c0_4] : memref<32x8xf32, #tpu.memory_space<vmem>>, vector<32x8xf32>
    tpu.vector_store %arg3[%c0_3, %c0_4], %4 {strides = array<i32>} : memref<32x8xf32, #tpu.memory_space<vmem>>, vector<32x8xf32>,
    %6 = tpu.iota {dimensions = array<i32: 0>} : vector<32x1xi32>
    %c32_i32 = arith.constant 32 : i32
    %7 = arith.muli %arg0, %c32_i32 : i32
    %8 = vector.broadcast %7 : i32 to vector<32x1xi32>
    %9 = arith.addi %6, %8 : vector<32x1xi32>
    %c32_i32_5 = arith.constant 32 : i32
    %10 = vector.broadcast %c32_i32_5 : i32 to vector<32x1xi32>
    %11 = arith.cmpi slt, %9, %10 : vector<32x1xi32>
    %cst_6 = arith.constant 0.000000e+00 : f32
    %12 = vector.shape_cast %11 : vector<32x1xi1> to vector<32x1xi1>
    %13 = vector.broadcast %12 : vector<32x1xi1> to vector<32x8xi1>
    %14 = vector.broadcast %cst_6 : f32 to vector<32x8xf32>
    %15 = arith.select %13, %4, %14 : vector<32x8xi1>, vector<32x8xf32>
    %cst_7 = arith.constant dense<0.000000e+00> : vector<8xf32>
    %16 = vector.multi_reduction <add>, %15, %cst_7 [0] : vector<32x8xf32> to vector<8xf32>
    %17 = vector.shape_cast %16 : vector<8xf32> to vector<1x8xf32>
    %c0_8 = arith.constant 0 : index
    %c0_9 = arith.constant 0 : index
    %18 = vector.load %arg4[%c0_8, %c0_9] : memref<1x8xf32, #tpu.memory_space<vmem>>, vector<1x8xf32>
    tpu.vector_store %arg4[%c0_8, %c0_9], %17 {strides = array<i32>} : memref<1x8xf32, #tpu.memory_space<vmem>>, vector<1x8xf32>,
    %19 = arith.mulf %15, %15 : vector<32x8xf32>
    %cst_10 = arith.constant dense<0.000000e+00> : vector<8xf32>
    %20 = vector.multi_reduction <add>, %19, %cst_10 [0] : vector<32x8xf32> to vector<8xf32>
    %21 = vector.shape_cast %20 : vector<8xf32> to vector<1x8xf32>
    %c0_11 = arith.constant 0 : index
    %c0_12 = arith.constant 0 : index
    %22 = vector.load %arg5[%c0_11, %c0_12] : memref<1x8xf32, #tpu.memory_space<vmem>>, vector<1x8xf32>
    tpu.vector_store %arg5[%c0_11, %c0_12], %21 {strides = array<i32>} : memref<1x8xf32, #tpu.memory_space<vmem>>, vector<1x8xf32>,
    return
  }
  func.func @transform_0(%arg0: i32) -> (i32, i32) {
    %c0_i32 = arith.constant 0 : i32
    %c0_i32_0 = arith.constant 0 : i32
    return %arg0, %c0_i32 : i32, i32
  }
  func.func @transform_1(%arg0: i32) -> (i32, i32) {
    %c0_i32 = arith.constant 0 : i32
    %c0_i32_0 = arith.constant 0 : i32
    %c0_i32_1 = arith.constant 0 : i32
    return %c0_i32, %c0_i32_0 : i32, i32
  }
  func.func @transform_2(%arg0: i32) -> (i32, i32) {
    %c0_i32 = arith.constant 0 : i32
    %c0_i32_0 = arith.constant 0 : i32
    return %arg0, %c0_i32 : i32, i32
  }
  func.func @transform_3(%arg0: i32) -> (i32, i32) {
    %c0_i32 = arith.constant 0 : i32
    %c0_i32_0 = arith.constant 0 : i32
    return %arg0, %c0_i32 : i32, i32
  }
  func.func @transform_4(%arg0: i32) -> (i32, i32) {
    %c0_i32 = arith.constant 0 : i32
    %c0_i32_0 = arith.constant 0 : i32
    return %arg0, %c0_i32 : i32, i32
  }
}

</mosaic_0001>

<llo_original>
// kernel: tpu_custom_call.1
$region0: #{tpu_custom_call.1}
  #allocation0 [shape = 'u32[]', space=smem, size = 0x4, offset = 0x4, fixed_abs, tag = 'smem constant byte address 0x4 - core index']
  #allocation1 [shape = 'u32[72,128]{1,0:T(1,128)}', space=vmem, size = 0x9000, scoped, tag = 'internal scratch']
  %s0 = inlined_call_operand.vmem [shape: f32[32,1], index: 0, kind: input, shape index: {}]
  %s1 = inlined_call_operand.vmem [shape: f32[1,8], index: 1, kind: input, shape index: {}]
  %s2 = inlined_call_operand.vmem [shape: f32[32,8], index: 2, kind: output, shape index: {0}]
  %s3 = inlined_call_operand.hbm [shape: f32[1,8], index: 3, kind: output, shape index: {1}]
  %s4 = inlined_call_operand.hbm [shape: f32[1,8], index: 4, kind: output, shape index: {2}]
  %5 = xla_tuple %s2, %s3, %s4
  %s6 = sld [smem:[#allocation0]]
  $region34: #{tpu_custom_call.1} parent=0
    _
  %s8 = ssub.s32 1, %s6
  %s9 = scalar_select 0, %s8, %s6
  $region1: #{tpu_custom_call.1} parent=0
    #allocation2 [shape = 'u8[512]{0}', space=vmem, size = 0x400, scoped, tag = 'output window, operand 1, single buffered']
    #allocation3 [shape = 's32[1]{0}', space=sflag, size = 0x4, scoped, tag = 'scoped memory for tpu_custom_call.1']
    #allocation4 [shape = 'u8[512]{0}', space=vmem, size = 0x400, scoped, tag = 'output window, operand 2, single buffered']
    #allocation5 [shape = 's32[1]{0}', space=sflag, size = 0x4, scoped, tag = 'scoped memory for tpu_custom_call.1']
    %10 = vsyncpa [#allocation3], 0
    %11 = vsyncpa [#allocation5], 0
    // Predicated region
    $region2: #{tpu_custom_call.1} parent=1 // pred_check
      _
    $region3: #{tpu_custom_call.1} parent=1 // pred_check_branch
      %13 = sbr.rel (0) target = $region5
    $region4: #{tpu_custom_call.1} parent=1 // pred_region
      _
    $region5: #{tpu_custom_call.1} parent=1 // pred_fallthru
      _
    // Predicated region
    $region6: #{tpu_custom_call.1} parent=1 // pred_check
      _
    $region7: #{tpu_custom_call.1} parent=1 // pred_check_branch
      %15 = sbr.rel (0) target = $region9
    $region8: #{tpu_custom_call.1} parent=1 // pred_region
      _
    $region9: #{tpu_custom_call.1} parent=1 // pred_fallthru
      _
    %v17 = vld [vmem:[%s0] sm:$0xff]
    %v18 = vld [vmem:[%s0 + $0x8] sm:$0xff]
    %v19 = vld [vmem:[%s0 + $0x10] sm:$0xff]
    %v20 = vld [vmem:[%s0 + $0x18] sm:$0xff]
    %v21 = vld [vmem:[%s1] sm:$0x1]
    %v22 = vpack.c.bf16 %v18, %v17
    %v23 = vpack.c.bf16 %v20, %v19
    %v24 = vpack.c.bf16 %v21, %v21
    %vm25 = vcmask 7168
    %v27 = vsel %vm25, %v22, 0
    %v30 = vsel %vm25, %v23, 0
    %vm32 = vcmask 1040384
    %v33 = vsel 0, 4294967295, 65535
    %v34 = vsel %vm32, %v33, 0
    %v36 = vand.u32 %v24, %v34
    %38 = vmatpush.bf16.msra.mxu0 0
    %39 = vmatpush.bf16.msra.mxu0 0
    %40 = vmatpush.bf16.msra.mxu0 0
    %41 = vmatpush.bf16.msra.mxu0 0
    %42 = vmatpush.bf16.msra.mxu0 0
    %43 = vmatpush.bf16.msra.mxu0 0
    %44 = vmatpush.bf16.msra.mxu0 0
    %45 = vmatpush.bf16.msra.mxu0 %v36
    %46 = vmatmul.bf16.gmra.mxu0 %v27
    %v47 = vpop.f32.mrf.mxu0
    %v48 = vadd.f32 0.0, %v47
    %v49 = vpop.f32.mrf.mxu0
    %v50 = vadd.f32 0.0, %v49
    %51 = vmatmul.bf16.gmra.mxu0 %v30
    %v52 = vpop.f32.mrf.mxu0
    %v53 = vadd.f32 0.0, %v52
    %v54 = vpop.f32.mrf.mxu0
    %v55 = vadd.f32 0.0, %v54
    %56 = vdwg.mxu0
    %vm57 = vcmask 64512
    %58 = vst.msk [vmem:[%s2] sm:$0xff] %vm57, %v48
    %59 = vst.msk [vmem:[%s2 + $0x8] sm:$0xff] %vm57, %v50
    %60 = vst.msk [vmem:[%s2 + $0x10] sm:$0xff] %vm57, %v53
    %61 = vst.msk [vmem:[%s2 + $0x18] sm:$0xff] %vm57, %v55
    %v62 = vlaneseq
    %v63 = vshrl.u32 %v62, 7
    %v64 = vadd.s32 %v63, 8
    %v65 = vadd.s32 %v63, 16
    %v66 = vadd.s32 %v63, 24
    %s67 = smul.u32 0, 32
    %v68 = vstv %s67
    %v69 = vadd.s32 %v63, %v68
    %v70 = vadd.s32 %v64, %v68
    %v71 = vadd.s32 %v65, %v68
    %v72 = vadd.s32 %v66, %v68
    %vm73 = vcmp.lt.s32.totalorder %v69, 32
    %vm74 = vcmp.lt.s32.totalorder %v70, 32
    %vm75 = vcmp.lt.s32.totalorder %v71, 32
    %vm76 = vcmp.lt.s32.totalorder %v72, 32
    %v77 = vsel %vm73, 1, 0
    %v78 = vsel %vm74, 1, 0
    %v79 = vsel %vm75, 1, 0
    %v80 = vsel %vm76, 1, 0
    %vm81 = vcmp.eq.s32.totalorder %v77, 1
    %vm82 = vcmp.eq.s32.totalorder %v78, 1
    %vm83 = vcmp.eq.s32.totalorder %v79, 1
    %vm84 = vcmp.eq.s32.totalorder %v80, 1
    %v85 = vsel %vm81, %v48, 0.0
    %v86 = vsel %vm82, %v50, 0.0
    %v87 = vsel %vm83, %v53, 0.0
    %v88 = vsel %vm84, %v55, 0.0
    %v89 = vsel %vm57, %v85, 0.0
    %v90 = vsel %vm57, %v86, 0.0
    %v91 = vadd.f32 %v89, %v90
    %v92 = vsel %vm57, %v87, 0.0
    %v93 = vadd.f32 %v91, %v92
    %v94 = vsel %vm57, %v88, 0.0
    %v95 = vadd.f32 %v93, %v94
    %v96 = vrot.slane %v95, 4
    %v97 = vadd.f32 %v95, %v96
    %v98 = vrot.slane %v97, 2
    %v99 = vadd.f32 %v97, %v98
    %v100 = vrot.slane %v99, 1
    %v101 = vadd.f32 %v99, %v100
    %vm102 = vcmask 57344
    %103 = vst.msk [vmem:[#allocation2] sm:$0x1] %vm102, %v101
    %v104 = vmul.f32 %v85, %v85
    %v105 = vmul.f32 %v86, %v86
    %v106 = vmul.f32 %v87, %v87
    %v107 = vmul.f32 %v88, %v88
    %v108 = vsel %vm57, %v104, 0.0
    %v109 = vsel %vm57, %v105, 0.0
    %v110 = vadd.f32 %v108, %v109
    %v111 = vsel %vm57, %v106, 0.0
    %v112 = vadd.f32 %v110, %v111
    %v113 = vsel %vm57, %v107, 0.0
    %v114 = vadd.f32 %v112, %v113
    %v115 = vrot.slane %v114, 4
    %v116 = vadd.f32 %v114, %v115
    %v117 = vrot.slane %v116, 2
    %v118 = vadd.f32 %v116, %v117
    %v119 = vrot.slane %v118, 1
    %v120 = vadd.f32 %v118, %v119
    %121 = vst.msk [vmem:[#allocation4] sm:$0x1] %vm102, %v120
    // Predicated region
    $region10: #{tpu_custom_call.1} parent=1 // pred_check
      _
    $region11: #{tpu_custom_call.1} parent=1 // pred_check_branch
      %123 = sbr.rel (0) target = $region13
    $region12: #{tpu_custom_call.1} parent=1 // pred_region
      _
    $region13: #{tpu_custom_call.1} parent=1 // pred_fallthru
      _
    // Predicated region
    $region14: #{tpu_custom_call.1} parent=1 // pred_check
      _
    $region15: #{tpu_custom_call.1} parent=1 // pred_check_branch
      %125 = sbr.rel (0) target = $region17
    $region16: #{tpu_custom_call.1} parent=1 // pred_region
      %127 = vsyncadd [#allocation3], 0
      %s129 = sshll.u32 [#allocation2], 4
      %s130 = int_to_ptr.vmem [resolvable:$true] %s129
      %s131 = sshll.u32 %s3, 4
      %s132 = int_to_ptr.hbm [resolvable:$true] %s131
      %134 = dma.vmem_to_hbm [thread:$0]  %s130, 16, %s132, [#allocation3]
    $region17: #{tpu_custom_call.1} parent=1 // pred_fallthru
      _
    // Predicated region
    $region18: #{tpu_custom_call.1} parent=1 // pred_check
      _
    $region19: #{tpu_custom_call.1} parent=1 // pred_check_branch
      %136 = sbr.rel (0) target = $region21
    $region20: #{tpu_custom_call.1} parent=1 // pred_region
      %138 = vsyncadd [#allocation5], 0
      %s140 = sshll.u32 [#allocation4], 4
      %s141 = int_to_ptr.vmem [resolvable:$true] %s140
      %s142 = sshll.u32 %s4, 4
      %s143 = int_to_ptr.hbm [resolvable:$true] %s142
      %145 = dma.vmem_to_hbm [thread:$0]  %s141, 16, %s143, [#allocation5]
    $region21: #{tpu_custom_call.1} parent=1 // pred_fallthru
      _
    // Predicated region
    $region22: #{tpu_custom_call.1} parent=1 // pred_check
      _
    $region23: #{tpu_custom_call.1} parent=1 // pred_check_branch
      %147 = sbr.rel (0) target = $region25
    $region24: #{tpu_custom_call.1} parent=1 // pred_region
      _
    $region25: #{tpu_custom_call.1} parent=1 // pred_fallthru
      _
    // Predicated region
    $region26: #{tpu_custom_call.1} parent=1 // pred_check
      _
    $region27: #{tpu_custom_call.1} parent=1 // pred_check_branch
      %149 = sbr.rel (0) target = $region29
    $region28: #{tpu_custom_call.1} parent=1 // pred_region
      %151 = dma.done [#allocation3], 16
    $region29: #{tpu_custom_call.1} parent=1 // pred_fallthru
      _
    // Predicated region
    $region30: #{tpu_custom_call.1} parent=1 // pred_check
      _
    $region31: #{tpu_custom_call.1} parent=1 // pred_check_branch
      %153 = sbr.rel (0) target = $region33
    $region32: #{tpu_custom_call.1} parent=1 // pred_region
      %155 = dma.done [#allocation5], 16
    $region33: #{tpu_custom_call.1} parent=1 // pred_fallthru
      _
    %156 = vsyncpa [#allocation3], 1
    %157 = vsyncpa [#allocation5], 1

</llo_original>
